<compile_context>
chip_gen: v7x
topology: tpu7x:2x2x1
jax: 0.10.0
libtpu: 0.0.40
codegen_flags: <defaults>
</compile_context>

<pallas_src>
import jax
import jax.numpy as jnp
from jax.experimental import pallas as pl
from jax.experimental.pallas import tpu as pltpu


def _make_l2_kernel(*, TBp, Np, BP, nBc, single_tile, needs_mask):
    """Kernel body for one (pair, row-split, row-tile) grid point.

    x_ref, y_ref : (1, TBp, Kp)   packed row tile of one snapshot pair
    op_ref       : (Kp, Np)       block-diagonal V-folded projection (resident)
    o_ref        : (1, 1, 1, 1)   per-(pair, split) partial ||.||_F^2
    acc_ref      : (8, Np) f32    vector accumulator scratch
    """

    def kernel(x_ref, y_ref, op_ref, o_ref, acc_ref):
        diff = x_ref[0].astype(jnp.float32) - y_ref[0].astype(jnp.float32)

        if needs_mask:
            # Ragged tail / clamped duplicate tiles: zero packed rows past the
            # true row count BP (select, so OOB garbage never propagates).
            tile = pl.program_id(1) * nBc + pl.program_id(2)
            rows = tile * TBp + jax.lax.broadcasted_iota(jnp.int32, diff.shape, 0)
            diff = jnp.where(rows < BP, diff, 0.0)

        t = jnp.dot(diff, op_ref[...], preferred_element_type=jnp.float32)
        sq = t * t

        if single_tile:
            # One row tile per pair: write the reduction directly.
            o_ref[...] = jnp.sum(sq).reshape(1, 1, 1, 1)
        else:
            b = pl.program_id(2)

            @pl.when(b == 0)
            def _init():
                acc_ref[...] = jnp.zeros_like(acc_ref)

            # (TBp, Np) -> (TBp//8, 8, Np) keeps (8,128) tiles intact; the
            # reduction over groups is plain vector adds (no XLU in the loop).
            acc_ref[...] += sq.reshape(TBp // 8, 8, Np).sum(axis=0)

            @pl.when(b == nBc - 1)
            def _fin():
                o_ref[...] = jnp.sum(acc_ref[...]).reshape(1, 1, 1, 1)

    return kernel


def l2_norm_pairs(xs, ys, R, V, *, max_tile_rows=1024, row_splits=None):
    """Batched Pallas version of [L2_torch(V, R)(xs[p], ys[p]) for p].

    xs, ys : (P, B, K) snapshot pairs.  Returns (P,) f32 norms.
    """
    assert xs.shape == ys.shape and xs.ndim == 3
    P, B, K = xs.shape
    R = jnp.asarray(R, jnp.float32)
    V = jnp.asarray(V, jnp.float32).reshape(-1)
    assert R.shape[0] == K and R.shape[1] == V.shape[0]
    N = R.shape[1]

    # ---- lane packing: fold `rpack` consecutive K-rows into one lane row ----
    rpack = 1
    if K < 128:
        for r in range(min(128 // K, B), 0, -1):
            if B % r == 0:
                rpack = r
                break
    Kp, BP = K * rpack, B // rpack
    xs_p = xs.reshape(P, BP, Kp)          # contiguous reshape: no data movement
    ys_p = ys.reshape(P, BP, Kp)

    # ---- fold V into R once; block-diagonal copy per packed row-group ----
    Rs = R * V[None, :]                   # (K, N); exact reordering of the scale
    if rpack == 1:
        OP = Rs
    else:
        OP = jnp.zeros((Kp, N * rpack), jnp.float32)
        for i in range(rpack):
            OP = OP.at[i * K:(i + 1) * K, i * N:(i + 1) * N].set(Rs)
    Np = OP.shape[1]

    # ---- row tiling: cap rows AND the per-tile working set (~8 MiB) ----
    bytes_per_row = 4 * (2 * 2 * Kp + 2 * Np)    # x,y double-buffered + t, t*t
    cap = max(8, (8 * 1024 * 1024 // bytes_per_row) // 8 * 8)
    tile_cap = max(8, min(max_tile_rows, cap))
    if BP <= tile_cap:
        TBp, nB = BP, 1                   # single full-extent row tile
    else:
        TBp = tile_cap                    # multiple of 8
        nB = -(-BP // TBp)                # ragged tail handled by in-kernel mask

    # ---- split the row-tile axis so both v7x TensorCores get work when the
    #      "pairs" axis is too small to parallelize (no-op on v5e/v6e) ----
    if row_splits is None:
        row_splits = 2 if (P == 1 and nB >= 2) else 1
    C = max(1, min(row_splits, nB))
    nBc = -(-nB // C)
    needs_mask = (C * nBc * TBp) != BP
    single_tile = nB == 1

    if C * nBc == nB:
        in_index = lambda p, c, b: (p, c * nBc + b, 0)
    else:
        # Clamp duplicate tiles of the last split into bounds (masked to 0).
        in_index = lambda p, c, b: (p, jnp.minimum(c * nBc + b, nB - 1), 0)

    kernel = _make_l2_kernel(TBp=TBp, Np=Np, BP=BP, nBc=nBc,
                             single_tile=single_tile, needs_mask=needs_mask)

    ssq = pl.pallas_call(
        kernel,
        out_shape=jax.ShapeDtypeStruct((P, C, 1, 1), jnp.float32),
        grid=(P, C, nBc),
        in_specs=[
            pl.BlockSpec((1, TBp, Kp), in_index),
            pl.BlockSpec((1, TBp, Kp), in_index),
            pl.BlockSpec((Kp, Np), lambda p, c, b: (0, 0)),   # resident operator
        ],
        out_specs=pl.BlockSpec((1, 1, 1, 1), lambda p, c, b: (p, c, 0, 0)),
        scratch_shapes=[pltpu.VMEM((8, Np), jnp.float32)],
        compiler_params=pltpu.CompilerParams(
            dimension_semantics=("parallel", "parallel", "arbitrary"),
            vmem_limit_bytes=32 * 1024 * 1024),
    )(xs_p, ys_p, OP)

    ssq = jnp.sum(ssq[:, :, 0, 0], axis=1)          # sum partials over row splits
    return jnp.sqrt(jnp.maximum(ssq, 0.0))


def l2_norm(x, y, R, V, **kwargs):
    """Module-equivalent forward: scalar ||V * ((x - y) @ R)||_F."""
    return l2_norm_pairs(x[None], y[None], R, V, **kwargs)[0]


def l2_norm_ref(x, y, R, V):
    tmp = jnp.dot(x - y, R, precision=jax.lax.Precision.HIGHEST)
    tmp = V.reshape(1, -1) * tmp
    return jnp.sqrt(jnp.sum(tmp * tmp))


if __name__ == "__main__":
    # Shapes consistent with the module's forward:
    #   x, y : (B, K) snapshots ; R : (K, N) projection ; V : (N,) volumes.
    key = jax.random.PRNGKey(0)
    kx, ky, kr, kv, kx2, ky2 = jax.random.split(key, 6)

    K, N = 32, 128
    R = jax.random.normal(kr, (K, N), dtype=jnp.float32) * 0.1
    # TODO(synk): V is np.load('physical_quantities/VD.npy') in the original;
    # synthesized deterministically in-script here (no file I/O allowed).
    V = jax.random.uniform(kv, (N,), dtype=jnp.float32) + 0.5

    # --- many snapshot pairs in one pallas_call (single row tile per pair) ---
    P, B = 4, 8
    xs = jax.random.normal(kx, (P, B, K), dtype=jnp.float32)
    ys = jax.random.normal(ky, (P, B, K), dtype=jnp.float32)
    norms = l2_norm_pairs(xs, ys, R, V)
    jax.block_until_ready(norms)
    ref_norms = jax.vmap(lambda a, b: l2_norm_ref(a, b, R, V))(xs, ys)
    assert jnp.allclose(norms, ref_norms, rtol=1e-3, atol=1e-6), (norms, ref_norms)

    # --- single pair, larger B: exercises row tiling, the ragged-tail mask and
    #     the 2-way row split (v7x dual-TensorCore path) ---
    B2 = 136                                   # -> 34 packed rows, 8-row tiles
    x2 = jax.random.normal(kx2, (B2, K), dtype=jnp.float32)
    y2 = jax.random.normal(ky2, (B2, K), dtype=jnp.float32)
    out = l2_norm(x2, y2, R, V, max_tile_rows=8)
    jax.block_until_ready(out)
    ref = l2_norm_ref(x2, y2, R, V)
    assert jnp.allclose(out, ref, rtol=1e-3, atol=1e-6), (out, ref)

    print("KERNEL_OK")
</pallas_src>

<mosaic_0001>
module attributes {stable_mosaic.version = 11 : i64} {
  func.func @kernel(%arg0: i32, %arg1: i32, %arg2: i32, %arg3: memref<1x2x128xf32, #tpu.memory_space<vmem>>, %arg4: memref<1x2x128xf32, #tpu.memory_space<vmem>>, %arg5: memref<128x512xf32, #tpu.memory_space<vmem>>, %arg6: memref<1x1x1x1xf32, #tpu.memory_space<vmem>>, %arg7: memref<8x512xf32, #tpu.memory_space<vmem>>) attributes {dimension_semantics = [#tpu.dimension_semantics<parallel>, #tpu.dimension_semantics<parallel>, #tpu.dimension_semantics<arbitrary>], iteration_bounds = array<i64: 4, 1, 1>, scalar_prefetch = 0 : i64, scratch_operands = 1 : i64, tpu.core_type = #tpu.core_type<tc>, window_params = [{transform_indices = @transform_0, window_bounds = array<i64: 1, 2, 128>}, {transform_indices = @transform_1, window_bounds = array<i64: 1, 2, 128>}, {pipeline_mode = #tpu.pipeline_mode<synchronous>, transform_indices = @transform_2, window_bounds = array<i64: 128, 512>}, {transform_indices = @transform_3, window_bounds = array<i64: 1, 1, 1, 1>}]} {
    %c0 = arith.constant 0 : index
    %c0_0 = arith.constant 0 : index
    %c0_1 = arith.constant 0 : index
    %0 = vector.load %arg3[%c0, %c0_0, %c0_1] : memref<1x2x128xf32, #tpu.memory_space<vmem>>, vector<1x2x128xf32>
    %1 = vector.shape_cast %0 : vector<1x2x128xf32> to vector<2x128xf32>
    %c0_2 = arith.constant 0 : index
    %c0_3 = arith.constant 0 : index
    %c0_4 = arith.constant 0 : index
    %2 = vector.load %arg4[%c0_2, %c0_3, %c0_4] : memref<1x2x128xf32, #tpu.memory_space<vmem>>, vector<1x2x128xf32>
    %3 = vector.shape_cast %2 : vector<1x2x128xf32> to vector<2x128xf32>
    %4 = arith.subf %1, %3 : vector<2x128xf32>
    %c0_5 = arith.constant 0 : index
    %c0_6 = arith.constant 0 : index
    %5 = vector.load %arg5[%c0_5, %c0_6] : memref<128x512xf32, #tpu.memory_space<vmem>>, vector<128x512xf32>
    %cst = arith.constant dense<0.000000e+00> : vector<2x512xf32>
    %6 = tpu.matmul %4, %5, %cst {dimension_numbers = #tpu.dot_dimension_numbers<[1], [0], [0], [1], [0, 0, 1, 1], [], []>} : vector<2x128xf32>, vector<128x512xf32>, vector<2x512xf32> -> vector<2x512xf32>
    %7 = arith.mulf %6, %6 : vector<2x512xf32>
    %8 = vector.shape_cast %7 : vector<2x512xf32> to vector<1x2x512xf32>
    %cst_7 = arith.constant dense<0.000000e+00> : vector<1xf32>
    %9 = vector.multi_reduction <add>, %8, %cst_7 [1, 2] : vector<1x2x512xf32> to vector<1xf32>
    %10 = vector.shape_cast %9 : vector<1xf32> to vector<1x1x1xf32>
    %11 = vector.extract %10[0, 0, 0] : f32 from vector<1x1x1xf32>
    %12 = vector.broadcast %11 : f32 to vector<1x1x1x1xf32>
    %c0_8 = arith.constant 0 : index
    %c0_9 = arith.constant 0 : index
    %c0_10 = arith.constant 0 : index
    %c0_11 = arith.constant 0 : index
    %13 = vector.load %arg6[%c0_8, %c0_9, %c0_10, %c0_11] : memref<1x1x1x1xf32, #tpu.memory_space<vmem>>, vector<1x1x1x1xf32>
    tpu.vector_store %arg6[%c0_8, %c0_9, %c0_10, %c0_11], %12 {strides = array<i32>} : memref<1x1x1x1xf32, #tpu.memory_space<vmem>>, vector<1x1x1x1xf32>,
    return
  }
  func.func @transform_0(%arg0: i32, %arg1: i32, %arg2: i32) -> (i32, i32, i32) {
    %c1_i32 = arith.constant 1 : i32
    %0 = arith.muli %arg1, %c1_i32 : i32
    %1 = arith.addi %0, %arg2 : i32
    %c0_i32 = arith.constant 0 : i32
    %c0_i32_0 = arith.constant 0 : i32
    return %arg0, %1, %c0_i32 : i32, i32, i32
  }
  func.func @transform_1(%arg0: i32, %arg1: i32, %arg2: i32) -> (i32, i32, i32) {
    %c1_i32 = arith.constant 1 : i32
    %0 = arith.muli %arg1, %c1_i32 : i32
    %1 = arith.addi %0, %arg2 : i32
    %c0_i32 = arith.constant 0 : i32
    %c0_i32_0 = arith.constant 0 : i32
    return %arg0, %1, %c0_i32 : i32, i32, i32
  }
  func.func @transform_2(%arg0: i32, %arg1: i32, %arg2: i32) -> (i32, i32) {
    %c0_i32 = arith.constant 0 : i32
    %c0_i32_0 = arith.constant 0 : i32
    %c0_i32_1 = arith.constant 0 : i32
    return %c0_i32, %c0_i32_0 : i32, i32
  }
  func.func @transform_3(%arg0: i32, %arg1: i32, %arg2: i32) -> (i32, i32, i32, i32) {
    %c0_i32 = arith.constant 0 : i32
    %c0_i32_0 = arith.constant 0 : i32
    %c0_i32_1 = arith.constant 0 : i32
    return %arg0, %arg1, %c0_i32, %c0_i32_0 : i32, i32, i32, i32
  }
}

</mosaic_0001>

<llo_original>
// kernel: tpu_custom_call.1
$region0: #{tpu_custom_call.1}
  #allocation0 [shape = 'u32[]', space=smem, size = 0x4, offset = 0x4, fixed_abs, tag = 'smem constant byte address 0x4 - core index']
  #allocation1 [shape = 'u32[144,128]{1,0:T(1,128)}', space=vmem, size = 0x12000, scoped, tag = 'internal scratch']
  #allocation2 [shape = 'f32[8,512]{1,0:T(8,128)}', space=vmem, size = 0x4000, scoped, tag = 'scratch operand']
  %s0 = inlined_call_operand.hbm [shape: f32[4,2,128], index: 0, kind: input, shape index: {}]
  %s1 = inlined_call_operand.hbm [shape: f32[4,2,128], index: 1, kind: input, shape index: {}]
  %s2 = inlined_call_operand.hbm [shape: f32[128,512], index: 2, kind: input, shape index: {}]
  %s3 = inlined_call_operand.vmem [shape: f32[4,1,1,1], index: 3, kind: output, shape index: {}]
  %s4 = sld [smem:[#allocation0]]
  $region57: #{tpu_custom_call.1} parent=0
    _
  %s6 = ssub.s32 1, %s4
  %s7 = scalar_select 0, %s6, %s4
  $region1: #{tpu_custom_call.1} parent=0
    #allocation3 [shape = 'u8[2048]{0}', space=vmem, size = 0x800, scoped, tag = 'input window, operand 0']
    #allocation4 [shape = 's32[2]{0}', space=sflag, size = 0x8, scoped, tag = 'scoped memory for tpu_custom_call.1']
    #allocation5 [shape = 'u8[2048]{0}', space=vmem, size = 0x800, scoped, tag = 'input window, operand 1']
    #allocation6 [shape = 's32[2]{0}', space=sflag, size = 0x8, scoped, tag = 'scoped memory for tpu_custom_call.1']
    #allocation7 [shape = 'u8[262144]{0}', space=vmem, size = 0x40000, scoped, tag = 'input window, operand 2, single buffered']
    %8 = vsyncpa [#allocation4], 0
    %s9 = scalar_lea.sflag [#allocation4], 1
    %10 = vsyncpa %s9, 0
    %11 = vsyncpa [#allocation6], 0
    %s12 = scalar_lea.sflag [#allocation6], 1
    %13 = vsyncpa %s12, 0
    loop: start=0, step=1, limit=6
    $region2: #{tpu_custom_call.1} parent=1 // loop_pre_header
      _
    $region3: #{tpu_custom_call.1} parent=1 // loop_header
      %s15 = sphi 0, %s19
      %p16 = scmp.ge.s32.totalorder %s15, 6
      %s22 = sphi 0, %s41
      %s23 = sphi 0, %s37
      %s24 = sphi 0, %s33
      %s25 = sphi 0, %s22
      %s26 = sphi 0, %s23
      %s27 = sphi 0, %s24
      %s28 = sphi 0, %s25
      %s29 = sphi 0, %s26
      %s30 = sphi 0, %s27
      %s48 = sphi 0, %s50
      %s51 = sphi 0, %s48
      %s52 = sphi 0, %s51
      %s68 = sphi 0, %s52
      %s78 = sphi 0, %s80
      %s81 = sphi 0, %s78
      %s82 = sphi 0, %s81
      %s98 = sphi 0, %s82
      %s102 = sphi 0, %s102
      %s104 = sphi 0, %s102
      %s105 = sphi 0, %s104
      %s119 = sphi 0, %s105
      %s127 = sphi 0, %s129
      %s130 = sphi 0, %s127
      %s131 = sphi 0, %s130
      %s147 = sphi 0, %s131
    $region4: #{tpu_custom_call.1} parent=1 // loop_header_branch
      %18 = sbr.rel (%p16) target = $region8
    $region5: #{tpu_custom_call.1} parent=1 // loop_body
      %s20 = ssub.s32 %s15, 1
      %s21 = ssub.s32 %s15, 2
      %s31 = sadd.s32 1, %s24
      %p32 = scmp.ge.s32.totalorder %s31, 1
      %s33 = scalar_select %p32, 0, %s31
      %s34 = sadd.s32 1, %s23
      %s35 = scalar_select %p32, %s34, %s23
      %p36 = scmp.ge.s32.totalorder %s35, 1
      %s37 = scalar_select %p36, 0, %s35
      %s38 = sadd.s32 1, %s22
      %s39 = scalar_select %p36, %s38, %s22
      %p40 = scmp.ge.s32.totalorder %s39, 4
      %s41 = scalar_select %p40, 0, %s39
      %s42 = sadd.s32 %s23, %s24
      %s43 = sadd.s32 %s37, %s33
      %s44 = ssub.s32 %s22, %s41
      %s45 = ssub.s32 %s42, %s43
      %s46 = sor.u32 %s44, %s45
      %p47 = scmp.eq.s32.totalorder %s46, 0
      %s49 = sadd.s32 %s48, 1
      %s50 = scalar_select %p47, %s48, %s49
      %p53 = pneg %p47
      %p54 = scmp.eq.s32.totalorder %s15, 3
      %p55 = por %p53, %p54
      %p56 = scmp.ne.s32.totalorder %s48, %s51
      %p57 = scmp.eq.s32.totalorder %s15, 0
      %p58 = por %p56, %p57
      %p59 = scmp.ne.s32.totalorder %s48, %s51
      %p60 = scmp.eq.s32.totalorder %s20, 3
      %p61 = por %p59, %p60
      %p62 = scmp.ne.s32.totalorder %s51, %s52
      %p63 = scmp.eq.s32.totalorder %s20, 0
      %p64 = por %p62, %p63
      %p65 = scmp.ne.s32.totalorder %s51, %s52
      %p66 = scmp.eq.s32.totalorder %s21, 3
      %p67 = por %p65, %p66
      %p69 = scmp.ne.s32.totalorder %s52, %s68
      %p70 = scmp.eq.s32.totalorder %s21, 0
      %p71 = por %p69, %p70
      %s72 = sadd.s32 %s23, %s24
      %s73 = sadd.s32 %s37, %s33
      %s74 = ssub.s32 %s22, %s41
      %s75 = ssub.s32 %s72, %s73
      %s76 = sor.u32 %s74, %s75
      %p77 = scmp.eq.s32.totalorder %s76, 0
      %s79 = sadd.s32 %s78, 1
      %s80 = scalar_select %p77, %s78, %s79
      %p83 = pneg %p77
      %p84 = scmp.eq.s32.totalorder %s15, 3
      %p85 = por %p83, %p84
      %p86 = scmp.ne.s32.totalorder %s78, %s81
      %p87 = scmp.eq.s32.totalorder %s15, 0
      %p88 = por %p86, %p87
      %p89 = scmp.ne.s32.totalorder %s78, %s81
      %p90 = scmp.eq.s32.totalorder %s20, 3
      %p91 = por %p89, %p90
      %p92 = scmp.ne.s32.totalorder %s81, %s82
      %p93 = scmp.eq.s32.totalorder %s20, 0
      %p94 = por %p92, %p93
      %p95 = scmp.ne.s32.totalorder %s81, %s82
      %p96 = scmp.eq.s32.totalorder %s21, 3
      %p97 = por %p95, %p96
      %p99 = scmp.ne.s32.totalorder %s82, %s98
      %p100 = scmp.eq.s32.totalorder %s21, 0
      %p101 = por %p99, %p100
      %s103 = sadd.s32 %s102, 1
      %p106 = scmp.eq.s32.totalorder %s15, 3
      %p107 = scmp.ne.s32.totalorder %s102, %s104
      %p108 = scmp.eq.s32.totalorder %s15, 0
      %p109 = por %p107, %p108
      %p110 = scmp.ne.s32.totalorder %s102, %s104
      %p111 = scmp.eq.s32.totalorder %s20, 3
      %p112 = por %p110, %p111
      %p113 = scmp.ne.s32.totalorder %s104, %s105
      %p114 = scmp.eq.s32.totalorder %s20, 0
      %p115 = por %p113, %p114
      %p116 = scmp.ne.s32.totalorder %s104, %s105
      %p117 = scmp.eq.s32.totalorder %s21, 3
      %p118 = por %p116, %p117
      %p120 = scmp.ne.s32.totalorder %s105, %s119
      %p121 = scmp.eq.s32.totalorder %s21, 0
      %p122 = por %p120, %p121
      %s123 = ssub.s32 %s22, %s41
      %s124 = ssub.s32 %s23, %s37
      %s125 = sor.u32 %s123, %s124
      %p126 = scmp.eq.s32.totalorder %s125, 0
      %s128 = sadd.s32 %s127, 1
      %s129 = scalar_select %p126, %s127, %s128
      %p132 = pneg %p126
      %p133 = scmp.eq.s32.totalorder %s15, 3
      %p134 = por %p132, %p133
      %p135 = scmp.ne.s32.totalorder %s127, %s130
      %p136 = scmp.eq.s32.totalorder %s15, 0
      %p137 = por %p135, %p136
      %p138 = scmp.ne.s32.totalorder %s127, %s130
      %p139 = scmp.eq.s32.totalorder %s20, 3
      %p140 = por %p138, %p139
      %p141 = scmp.ne.s32.totalorder %s130, %s131
      %p142 = scmp.eq.s32.totalorder %s20, 0
      %p143 = por %p141, %p142
      %p144 = scmp.ne.s32.totalorder %s130, %s131
      %p145 = scmp.eq.s32.totalorder %s21, 3
      %p146 = por %p144, %p145
      %p148 = scmp.ne.s32.totalorder %s131, %s147
      %p149 = scmp.eq.s32.totalorder %s21, 0
      %p150 = por %p148, %p149
      %p151 = scmp.le.s32.totalorder 1, %s15
      %p152 = scmp.lt.s32.totalorder %s15, 5
      %p153 = pnand %p151, %p152
      %p154 = pneg %p153
      // Predicated region
      $region9: #{tpu_custom_call.1} parent=5 // pred_check
        _
      $region10: #{tpu_custom_call.1} parent=5 // pred_check_branch
        %156 = sbr.rel (%p153) target = $region12
      $region11: #{tpu_custom_call.1} parent=5 // pred_region
        %s157 = ssub.s32 %s15, 1
        // Predicated region
        $region13: #{tpu_custom_call.1} parent=11 // pred_check
          %p158 = pneg %p115
        $region14: #{tpu_custom_call.1} parent=11 // pred_check_branch
          %160 = sbr.rel (%p158) target = $region16
        $region15: #{tpu_custom_call.1} parent=11 // pred_region
          %s162 = ssub.s32 8192, 8192
          %163 = vsyncadd [#allocation6], %s162
          %s164 = sshll.u32 [#allocation7], 4
          %s165 = int_to_ptr.vmem [resolvable:$true] %s164
          %170 = dma.hbm_to_vmem [thread:$0]  %s2, 8192, %s165, [#allocation6], 512, 512, 32
        $region16: #{tpu_custom_call.1} parent=11 // pred_fallthru
          _
      $region12: #{tpu_custom_call.1} parent=5 // pred_fallthru
        _
      %p171 = scmp.lt.s32.totalorder %s15, 4
      // Predicated region
      $region17: #{tpu_custom_call.1} parent=5 // pred_check
        %p172 = pneg %p171
      $region18: #{tpu_custom_call.1} parent=5 // pred_check_branch
        %174 = sbr.rel (%p172) target = $region20
      $region19: #{tpu_custom_call.1} parent=5 // pred_region
        // Predicated region
        $region21: #{tpu_custom_call.1} parent=19 // pred_check
          %p175 = pneg %p58
        $region22: #{tpu_custom_call.1} parent=19 // pred_check_branch
          %177 = sbr.rel (%p175) target = $region24
        $region23: #{tpu_custom_call.1} parent=19 // pred_region
          %s178 = sand.u32 %s48, 1
          %s179 = scalar_lea.sflag [#allocation4], %s178
          %s180 = sand.u32 %s48, 1
          %s181 = smul.addr %s180, 2
          %s182 = scalar_lea.vmem [#allocation3], %s181
          %s183 = sadd.s32 %s23, %s24
          %s185 = ssub.s32 32, 32
          %186 = vsyncadd %s179, %s185
          %s187 = sadd.s32 %s183, %s22
          %s188 = smul.addr %s187, 32
          %s189 = scalar_lea.hbm %s0, %s188
          %s191 = sshll.u32 %s182, 4
          %s192 = int_to_ptr.vmem [resolvable:$true] %s191
          %194 = dma.hbm_to_vmem [thread:$0]  %s189, 32, %s192, %s179
        $region24: #{tpu_custom_call.1} parent=19 // pred_fallthru
          _
        // Predicated region
        $region25: #{tpu_custom_call.1} parent=19 // pred_check
          %p195 = pneg %p88
        $region26: #{tpu_custom_call.1} parent=19 // pred_check_branch
          %197 = sbr.rel (%p195) target = $region28
        $region27: #{tpu_custom_call.1} parent=19 // pred_region
          %s198 = sand.u32 %s15, 1
          %s199 = scalar_lea.sflag [#allocation6], %s198
          %s200 = sand.u32 %s78, 1
          %s201 = smul.addr %s200, 2
          %s202 = scalar_lea.vmem [#allocation5], %s201
          %s203 = sadd.s32 %s23, %s24
          %s205 = ssub.s32 32, 32
          %206 = vsyncadd %s199, %s205
          %s207 = sadd.s32 %s203, %s22
          %s208 = smul.addr %s207, 32
          %s209 = scalar_lea.hbm %s1, %s208
          %s211 = sshll.u32 %s202, 4
          %s212 = int_to_ptr.vmem [resolvable:$true] %s211
          %214 = dma.hbm_to_vmem [thread:$0]  %s209, 32, %s212, %s199
        $region28: #{tpu_custom_call.1} parent=19 // pred_fallthru
          _
      $region20: #{tpu_custom_call.1} parent=5 // pred_fallthru
        _
      %p215 = scmp.le.s32.totalorder 1, %s15
      %p216 = scmp.lt.s32.totalorder %s15, 5
      %p217 = pnand %p215, %p216
      %p218 = pneg %p217
      // Predicated region
      $region29: #{tpu_custom_call.1} parent=5 // pred_check
        _
      $region30: #{tpu_custom_call.1} parent=5 // pred_check_branch
        %220 = sbr.rel (%p217) target = $region32
      $region31: #{tpu_custom_call.1} parent=5 // pred_region
        %s221 = ssub.s32 %s15, 1
        %s222 = sand.u32 %s51, 1
        %s223 = scalar_lea.sflag [#allocation4], %s222
        %s224 = sand.u32 %s51, 1
        %s225 = smul.addr %s224, 2
        %s226 = scalar_lea.vmem [#allocation3], %s225
        // Predicated region
        $region33: #{tpu_custom_call.1} parent=31 // pred_check
          %p227 = pneg %p64
        $region34: #{tpu_custom_call.1} parent=31 // pred_check_branch
          %229 = sbr.rel (%p227) target = $region36
        $region35: #{tpu_custom_call.1} parent=31 // pred_region
          %230 = dma.done %s223, 32
        $region36: #{tpu_custom_call.1} parent=31 // pred_fallthru
          _
        %s231 = sand.u32 %s20, 1
        %s232 = scalar_lea.sflag [#allocation6], %s231
        %s233 = sand.u32 %s81, 1
        %s234 = smul.addr %s233, 2
        %s235 = scalar_lea.vmem [#allocation5], %s234
        // Predicated region
        $region37: #{tpu_custom_call.1} parent=31 // pred_check
          %p236 = pneg %p94
        $region38: #{tpu_custom_call.1} parent=31 // pred_check_branch
          %238 = sbr.rel (%p236) target = $region40
        $region39: #{tpu_custom_call.1} parent=31 // pred_region
          %239 = dma.done %s232, 32
        $region40: #{tpu_custom_call.1} parent=31 // pred_fallthru
          _
        // Predicated region
        $region41: #{tpu_custom_call.1} parent=31 // pred_check
          %p240 = pneg %p115
        $region42: #{tpu_custom_call.1} parent=31 // pred_check_branch
          %242 = sbr.rel (%p240) target = $region44
        $region43: #{tpu_custom_call.1} parent=31 // pred_region
          %243 = dma.done [#allocation6], 8192
        $region44: #{tpu_custom_call.1} parent=31 // pred_fallthru
          _
        %s244 = sand.u32 %s51, 1
        %s245 = scalar_lea.sflag [#allocation4], %s244
        %s246 = sand.u32 %s51, 1
        %s247 = smul.addr %s246, 2
        %s248 = scalar_lea.vmem [#allocation3], %s247
        %p249 = pneg %p64
        %p250 = pneg %p61
        %s251 = sand.u32 %s20, 1
        %s252 = scalar_lea.sflag [#allocation6], %s251
        %s253 = sand.u32 %s81, 1
        %s254 = smul.addr %s253, 2
        %s255 = scalar_lea.vmem [#allocation5], %s254
        %p256 = pneg %p94
        %p257 = pneg %p91
        %p258 = pneg %p115
        %p259 = pneg %p112
        %p260 = pneg %p143
        %p261 = pneg %p140
        %p262 = scmp.lt.s32.totalorder %s25, 3
        %s263 = scalar_select %p262, %s25, 3
        %p264 = scmp.lt.s32.totalorder %s26, 0
        %s265 = scalar_select %p264, %s26, 0
        %s266 = sadd.s32 %s265, %s263
        %s267 = scalar_lea.vmem %s3, %s266
        %s268 = sadd.s32 %s26, %s27
        %s269 = sadd.s32 %s26, %s27
        %p270 = scmp.lt.s32.totalorder %s25, 3
        %s271 = scalar_select %p270, %s25, 3
        %p272 = scmp.lt.s32.totalorder %s26, 0
        %s273 = scalar_select %p272, %s26, 0
        %s274 = sadd.s32 %s273, %s271
        %s275 = scalar_lea.vmem %s3, %s274
        %v276 = vld [vmem:[%s226] sm:$0x3]
        %v277 = vld [vmem:[%s235] sm:$0x3]
        %v278 = vsub.f32 %v276, %v277
        %v279 = vld [vmem:[#allocation7] sm:$0xff]
        %v280 = vld [vmem:[#allocation7 + $0x8] sm:$0xff]
        %v281 = vld [vmem:[#allocation7 + $0x10] sm:$0xff]
        %v282 = vld [vmem:[#allocation7 + $0x18] sm:$0xff]
        %v283 = vld [vmem:[#allocation7 + $0x20] sm:$0xff]
        %v284 = vld [vmem:[#allocation7 + $0x28] sm:$0xff]
        %v285 = vld [vmem:[#allocation7 + $0x30] sm:$0xff]
        %v286 = vld [vmem:[#allocation7 + $0x38] sm:$0xff]
        %v287 = vld [vmem:[#allocation7 + $0x40] sm:$0xff]
        %v288 = vld [vmem:[#allocation7 + $0x48] sm:$0xff]
        %v289 = vld [vmem:[#allocation7 + $0x50] sm:$0xff]
        %v290 = vld [vmem:[#allocation7 + $0x58] sm:$0xff]
        %v291 = vld [vmem:[#allocation7 + $0x60] sm:$0xff]
        %v292 = vld [vmem:[#allocation7 + $0x68] sm:$0xff]
        %v293 = vld [vmem:[#allocation7 + $0x70] sm:$0xff]
        %v294 = vld [vmem:[#allocation7 + $0x78] sm:$0xff]
        %v295 = vld [vmem:[#allocation7 + $0x80] sm:$0xff]
        %v296 = vld [vmem:[#allocation7 + $0x88] sm:$0xff]
        %v297 = vld [vmem:[#allocation7 + $0x90] sm:$0xff]
        %v298 = vld [vmem:[#allocation7 + $0x98] sm:$0xff]
        %v299 = vld [vmem:[#allocation7 + $0xa0] sm:$0xff]
        %v300 = vld [vmem:[#allocation7 + $0xa8] sm:$0xff]
        %v301 = vld [vmem:[#allocation7 + $0xb0] sm:$0xff]
        %v302 = vld [vmem:[#allocation7 + $0xb8] sm:$0xff]
        %v303 = vld [vmem:[#allocation7 + $0xc0] sm:$0xff]
        %v304 = vld [vmem:[#allocation7 + $0xc8] sm:$0xff]
        %v305 = vld [vmem:[#allocation7 + $0xd0] sm:$0xff]
        %v306 = vld [vmem:[#allocation7 + $0xd8] sm:$0xff]
        %v307 = vld [vmem:[#allocation7 + $0xe0] sm:$0xff]
        %v308 = vld [vmem:[#allocation7 + $0xe8] sm:$0xff]
        %v309 = vld [vmem:[#allocation7 + $0xf0] sm:$0xff]
        %v310 = vld [vmem:[#allocation7 + $0xf8] sm:$0xff]
        %v311 = vld [vmem:[#allocation7 + $0x100] sm:$0xff]
        %v312 = vld [vmem:[#allocation7 + $0x108] sm:$0xff]
        %v313 = vld [vmem:[#allocation7 + $0x110] sm:$0xff]
        %v314 = vld [vmem:[#allocation7 + $0x118] sm:$0xff]
        %v315 = vld [vmem:[#allocation7 + $0x120] sm:$0xff]
        %v316 = vld [vmem:[#allocation7 + $0x128] sm:$0xff]
        %v317 = vld [vmem:[#allocation7 + $0x130] sm:$0xff]
        %v318 = vld [vmem:[#allocation7 + $0x138] sm:$0xff]
        %v319 = vld [vmem:[#allocation7 + $0x140] sm:$0xff]
        %v320 = vld [vmem:[#allocation7 + $0x148] sm:$0xff]
        %v321 = vld [vmem:[#allocation7 + $0x150] sm:$0xff]
        %v322 = vld [vmem:[#allocation7 + $0x158] sm:$0xff]
        %v323 = vld [vmem:[#allocation7 + $0x160] sm:$0xff]
        %v324 = vld [vmem:[#allocation7 + $0x168] sm:$0xff]
        %v325 = vld [vmem:[#allocation7 + $0x170] sm:$0xff]
        %v326 = vld [vmem:[#allocation7 + $0x178] sm:$0xff]
        %v327 = vld [vmem:[#allocation7 + $0x180] sm:$0xff]
        %v328 = vld [vmem:[#allocation7 + $0x188] sm:$0xff]
        %v329 = vld [vmem:[#allocation7 + $0x190] sm:$0xff]
        %v330 = vld [vmem:[#allocation7 + $0x198] sm:$0xff]
        %v331 = vld [vmem:[#allocation7 + $0x1a0] sm:$0xff]
        %v332 = vld [vmem:[#allocation7 + $0x1a8] sm:$0xff]
        %v333 = vld [vmem:[#allocation7 + $0x1b0] sm:$0xff]
        %v334 = vld [vmem:[#allocation7 + $0x1b8] sm:$0xff]
        %v335 = vld [vmem:[#allocation7 + $0x1c0] sm:$0xff]
        %v336 = vld [vmem:[#allocation7 + $0x1c8] sm:$0xff]
        %v337 = vld [vmem:[#allocation7 + $0x1d0] sm:$0xff]
        %v338 = vld [vmem:[#allocation7 + $0x1d8] sm:$0xff]
        %v339 = vld [vmem:[#allocation7 + $0x1e0] sm:$0xff]
        %v340 = vld [vmem:[#allocation7 + $0x1e8] sm:$0xff]
        %v341 = vld [vmem:[#allocation7 + $0x1f0] sm:$0xff]
        %v342 = vld [vmem:[#allocation7 + $0x1f8] sm:$0xff]
        %343 = vmatprep.subr.mxu0 %v280
        %344 = vmatpush1.msra.mxu0 %v279
        %345 = vmatprep.subr.mxu0 %v284
        %346 = vmatpush1.msra.mxu0 %v283
        %347 = vmatprep.subr.mxu0 %v288
        %348 = vmatpush1.msra.mxu0 %v287
        %349 = vmatprep.subr.mxu0 %v292
        %350 = vmatpush1.msra.mxu0 %v291
        %351 = vmatprep.subr.mxu0 %v296
        %352 = vmatpush1.msra.mxu0 %v295
        %353 = vmatprep.subr.mxu0 %v300
        %354 = vmatpush1.msra.mxu0 %v299
        %355 = vmatprep.subr.mxu0 %v304
        %356 = vmatpush1.msra.mxu0 %v303
        %357 = vmatprep.subr.mxu0 %v308
        %358 = vmatpush1.msra.mxu0 %v307
        %359 = vmatprep.subr.mxu0 %v312
        %360 = vmatpush1.msra.mxu0 %v311
        %361 = vmatprep.subr.mxu0 %v316
        %362 = vmatpush1.msra.mxu0 %v315
        %363 = vmatprep.subr.mxu0 %v320
        %364 = vmatpush1.msra.mxu0 %v319
        %365 = vmatprep.subr.mxu0 %v324
        %366 = vmatpush1.msra.mxu0 %v323
        %367 = vmatprep.subr.mxu0 %v328
        %368 = vmatpush1.msra.mxu0 %v327
        %369 = vmatprep.subr.mxu0 %v332
        %370 = vmatpush1.msra.mxu0 %v331
        %371 = vmatprep.subr.mxu0 %v336
        %372 = vmatpush1.msra.mxu0 %v335
        %373 = vmatprep.subr.mxu0 %v340
        %374 = vmatpush1.msra.mxu0 %v339
        %375 = vmatprep.subr.mxu0 0.0
        %376 = vmatpush1.msra.mxu0 0.0
        %377 = vmatprep.subr.mxu0 0.0
        %378 = vmatpush1.msra.mxu0 0.0
        %379 = vmatprep.subr.mxu0 0.0
        %380 = vmatpush1.msra.mxu0 0.0
        %381 = vmatprep.subr.mxu0 0.0
        %382 = vmatpush1.msra.mxu0 0.0
        %383 = vmatprep.subr.mxu0 0.0
        %384 = vmatpush1.msra.mxu0 0.0
        %385 = vmatprep.subr.mxu0 0.0
        %386 = vmatpush1.msra.mxu0 0.0
        %387 = vmatprep.subr.mxu0 0.0
        %388 = vmatpush1.msra.mxu0 0.0
        %389 = vmatprep.subr.mxu0 0.0
        %390 = vmatpush1.msra.mxu0 0.0
        %391 = vmatprep.subr.mxu0 0.0
        %392 = vmatpush1.msra.mxu0 0.0
        %393 = vmatprep.subr.mxu0 0.0
        %394 = vmatpush1.msra.mxu0 0.0
        %395 = vmatprep.subr.mxu0 0.0
        %396 = vmatpush1.msra.mxu0 0.0
        %397 = vmatprep.subr.mxu0 0.0
        %398 = vmatpush1.msra.mxu0 0.0
        %399 = vmatprep.subr.mxu0 0.0
        %400 = vmatpush1.msra.mxu0 0.0
        %401 = vmatprep.subr.mxu0 0.0
        %402 = vmatpush1.msra.mxu0 0.0
        %403 = vmatprep.subr.mxu0 0.0
        %404 = vmatpush1.msra.mxu0 0.0
        %405 = vmatprep.subr.mxu0 0.0
        %406 = vmatpush1.msra.mxu0 0.0
        %407 = vmatprep.mubr.f32.mxu0 0.0
        %408 = vmatmul.mubr.f32.gmra.mrb[0].mxu0 %v278
        %v409 = vpop.f32.mrb[0].mxu0
        %v410 = vadd.f32 0.0, %v409
        %v411 = vpop.f32.mrb[0].mxu0
        %v412 = vadd.f32 0.0, %v411
        %413 = vdwg.mxu0
        %414 = vmatprep.subr.mxu0 %v282
        %415 = vmatpush1.msra.mxu0 %v281
        %416 = vmatprep.subr.mxu0 %v286
        %417 = vmatpush1.msra.mxu0 %v285
        %418 = vmatprep.subr.mxu0 %v290
        %419 = vmatpush1.msra.mxu0 %v289
        %420 = vmatprep.subr.mxu0 %v294
        %421 = vmatpush1.msra.mxu0 %v293
        %422 = vmatprep.subr.mxu0 %v298
        %423 = vmatpush1.msra.mxu0 %v297
        %424 = vmatprep.subr.mxu0 %v302
        %425 = vmatpush1.msra.mxu0 %v301
        %426 = vmatprep.subr.mxu0 %v306
        %427 = vmatpush1.msra.mxu0 %v305
        %428 = vmatprep.subr.mxu0 %v310
        %429 = vmatpush1.msra.mxu0 %v309
        %430 = vmatprep.subr.mxu0 %v314
        %431 = vmatpush1.msra.mxu0 %v313
        %432 = vmatprep.subr.mxu0 %v318
        %433 = vmatpush1.msra.mxu0 %v317
        %434 = vmatprep.subr.mxu0 %v322
        %435 = vmatpush1.msra.mxu0 %v321
        %436 = vmatprep.subr.mxu0 %v326
        %437 = vmatpush1.msra.mxu0 %v325
        %438 = vmatprep.subr.mxu0 %v330
        %439 = vmatpush1.msra.mxu0 %v329
        %440 = vmatprep.subr.mxu0 %v334
        %441 = vmatpush1.msra.mxu0 %v333
        %442 = vmatprep.subr.mxu0 %v338
        %443 = vmatpush1.msra.mxu0 %v337
        %444 = vmatprep.subr.mxu0 %v342
        %445 = vmatpush1.msra.mxu0 %v341
        %446 = vmatprep.subr.mxu0 0.0
        %447 = vmatpush1.msra.mxu0 0.0
        %448 = vmatprep.subr.mxu0 0.0
        %449 = vmatpush1.msra.mxu0 0.0
        %450 = vmatprep.subr.mxu0 0.0
        %451 = vmatpush1.msra.mxu0 0.0
        %452 = vmatprep.subr.mxu0 0.0
        %453 = vmatpush1.msra.mxu0 0.0
        %454 = vmatprep.subr.mxu0 0.0
        %455 = vmatpush1.msra.mxu0 0.0
        %456 = vmatprep.subr.mxu0 0.0
        %457 = vmatpush1.msra.mxu0 0.0
        %458 = vmatprep.subr.mxu0 0.0
        %459 = vmatpush1.msra.mxu0 0.0
        %460 = vmatprep.subr.mxu0 0.0
        %461 = vmatpush1.msra.mxu0 0.0
        %462 = vmatprep.subr.mxu0 0.0
        %463 = vmatpush1.msra.mxu0 0.0
        %464 = vmatprep.subr.mxu0 0.0
        %465 = vmatpush1.msra.mxu0 0.0
        %466 = vmatprep.subr.mxu0 0.0
        %467 = vmatpush1.msra.mxu0 0.0
        %468 = vmatprep.subr.mxu0 0.0
        %469 = vmatpush1.msra.mxu0 0.0
        %470 = vmatprep.subr.mxu0 0.0
        %471 = vmatpush1.msra.mxu0 0.0
        %472 = vmatprep.subr.mxu0 0.0
        %473 = vmatpush1.msra.mxu0 0.0
        %474 = vmatprep.subr.mxu0 0.0
        %475 = vmatpush1.msra.mxu0 0.0
        %476 = vmatprep.subr.mxu0 0.0
        %477 = vmatpush1.msra.mxu0 0.0
        %478 = vmatprep.mubr.f32.mxu0 0.0
        %479 = vmatmul.mubr.f32.gmra.mrb[0].mxu0 %v278
        %v480 = vpop.f32.mrb[0].mxu0
        %v481 = vadd.f32 0.0, %v480
        %v482 = vpop.f32.mrb[0].mxu0
        %v483 = vadd.f32 0.0, %v482
        %484 = vdwg.mxu0
        %v485 = vmul.f32 %v410, %v410
        %v486 = vmul.f32 %v412, %v412
        %v487 = vmul.f32 %v481, %v481
        %v488 = vmul.f32 %v483, %v483
        %vm489 = vcmask 1041408
        %v490 = vsel %vm489, %v485, 0.0
        %v491 = vsel %vm489, %v486, 0.0
        %v492 = vadd.f32 %v490, %v491
        %v493 = vsel %vm489, %v487, 0.0
        %v494 = vadd.f32 %v492, %v493
        %v495 = vsel %vm489, %v488, 0.0
        %v496 = vadd.f32 %v494, %v495
        %497 = vadd.xlane.f32.xlu0 %v496
        %v498 = vpop.xlane.xlu0 %497
        %v499 = vrot.slane %v498, 4
        %v500 = vadd.f32 %v498, %v499
        %v501 = vrot.slane %v500, 2
        %v502 = vadd.f32 %v500, %v501
        %v503 = vrot.slane %v502, 1
        %v504 = vadd.f32 %v502, %v503
        %s505 = vtos %v504
        %v506 = vstv %s505
        %vm507 = vcmask 0
        %508 = vst.msk [vmem:[%s275] sm:$0x1] %vm507, %v506
        %p509 = scmp.lt.s32.totalorder %s25, 3
        %s510 = scalar_select %p509, %s25, 3
        %p511 = scmp.lt.s32.totalorder %s26, 0
        %s512 = scalar_select %p511, %s26, 0
        %s513 = sadd.s32 %s512, %s510
        %s514 = scalar_lea.vmem %s3, %s513
        // Predicated region
        $region45: #{tpu_custom_call.1} parent=31 // pred_check
          %p515 = pneg %p140
        $region46: #{tpu_custom_call.1} parent=31 // pred_check_branch
          %517 = sbr.rel (%p515) target = $region48
        $region47: #{tpu_custom_call.1} parent=31 // pred_region
          _
        $region48: #{tpu_custom_call.1} parent=31 // pred_fallthru
          _
      $region32: #{tpu_custom_call.1} parent=5 // pred_fallthru
        _
      %p518 = scmp.le.s32.totalorder 2, %s15
      // Predicated region
      $region49: #{tpu_custom_call.1} parent=5 // pred_check
        %p519 = pneg %p518
      $region50: #{tpu_custom_call.1} parent=5 // pred_check_branch
        %521 = sbr.rel (%p519) target = $region52
      $region51: #{tpu_custom_call.1} parent=5 // pred_region
        %s522 = ssub.s32 %s15, 2
        // Predicated region
        $region53: #{tpu_custom_call.1} parent=51 // pred_check
          %p523 = pneg %p146
        $region54: #{tpu_custom_call.1} parent=51 // pred_check_branch
          %525 = sbr.rel (%p523) target = $region56
        $region55: #{tpu_custom_call.1} parent=51 // pred_region
          %p526 = scmp.lt.s32.totalorder %s28, 3
          %s527 = scalar_select %p526, %s28, 3
          %p528 = scmp.lt.s32.totalorder %s29, 0
          %s529 = scalar_select %p528, %s29, 0
          %s530 = sadd.s32 %s529, %s527
          %s531 = scalar_lea.vmem %s3, %s530
        $region56: #{tpu_custom_call.1} parent=51 // pred_fallthru
          _
      $region52: #{tpu_custom_call.1} parent=5 // pred_fallthru
        _
    $region6: #{tpu_custom_call.1} parent=1 // loop_footer
      %s19 = sadd.s32 1, %s15
    $region7: #{tpu_custom_call.1} parent=1 // loop_footer_branch
      %14 = sbr.rel target = $region3
    $region8: #{tpu_custom_call.1} parent=1 // loop_exit
      _
    %532 = vsyncpa [#allocation4], 1
    %s533 = scalar_lea.sflag [#allocation4], 1
    %534 = vsyncpa %s533, 1
    %535 = vsyncpa [#allocation6], 1
    %s536 = scalar_lea.sflag [#allocation6], 1
    %537 = vsyncpa %s536, 1

</llo_original>
